<compile_context>
chip_gen: v5e
topology: v5e:2x2
jax: 0.10.0
libtpu: 0.0.40
codegen_flags: <defaults>
</compile_context>

<pallas_src>
import functools

import jax
import jax.numpy as jnp
from jax.experimental import pallas as pl
from jax.experimental.pallas import tpu as pltpu


# ----------------------------------------------------------------------------
# Kernel
# ----------------------------------------------------------------------------
def _make_rope_kernel(d_half: int, hf: int):
    """Build the RoPE kernel for heads flattened into the lane axis.

    Block shapes seen by the kernel:
      x_ref, o_ref            : [tile_S, B, H*F]
      cos_ref/sin_hi/sin_lo   : [tile_S, 1, H*F]  (f32, broadcast over batch)
    """
    pos_shift = d_half            # supplies x[j - d/2] at in-head positions [d/2, d)
    neg_shift = hf - d_half       # == roll by -d/2: supplies x[j + d/2] at positions [0, d/2)

    def kernel(x_ref, cos_ref, sin_hi_ref, sin_lo_ref, o_ref):
        x = x_ref[...].astype(jnp.float32)
        # Lane rotations on the XLU (free alongside the VPU mul/adds). Positions
        # where the roll crosses a head boundary are multiplied by 0 in the
        # pre-masked sin tables, so they never contribute.
        x_hi = pltpu.roll(x, shift=pos_shift, axis=2)
        x_lo = pltpu.roll(x, shift=neg_shift, axis=2)
        out = x * cos_ref[...] + x_hi * sin_hi_ref[...] + x_lo * sin_lo_ref[...]
        o_ref[...] = out.astype(o_ref.dtype)

    return kernel


# ----------------------------------------------------------------------------
# cos/sin table construction (cheap plain-JAX glue, f32)
# ----------------------------------------------------------------------------
def _build_rope_tables(seq_len: int, d: int, n_heads: int, feat_dim: int, base: int):
    d_half = d // 2
    theta = 1.0 / (base ** (jnp.arange(0, d, 2, dtype=jnp.float32) / d))     # [d/2]
    seq_idx = jnp.arange(seq_len, dtype=jnp.float32)                         # [S]
    idx_theta = jnp.einsum("n,d->nd", seq_idx, theta)                        # [S, d/2]
    idx_theta2 = jnp.concatenate([idx_theta, idx_theta], axis=1)             # [S, d]

    cos = jnp.cos(idx_theta2)                                                # [S, d]
    sin = jnp.sin(idx_theta2)                                                # [S, d]

    pad = feat_dim - d
    # Pass-through features: cos = 1, sin = 0  ->  out = x with no slicing needed.
    cos_head = jnp.pad(cos, ((0, 0), (0, pad)), constant_values=1.0)         # [S, F]
    sin_head = jnp.pad(sin, ((0, 0), (0, pad)), constant_values=0.0)         # [S, F]

    j = jnp.arange(feat_dim)
    hi_mask = (j >= d_half) & (j < d)        # uses +sin * x[j - d/2]
    lo_mask = j < d_half                     # uses -sin * x[j + d/2]
    sin_hi = jnp.where(hi_mask[None, :], sin_head, 0.0)                      # [S, F]
    sin_lo = jnp.where(lo_mask[None, :], -sin_head, 0.0)                     # [S, F]

    def tile_heads(t):  # [S, F] -> [S, 1, H*F] (repeated per head)
        return jnp.tile(t, (1, n_heads)).reshape(seq_len, 1, n_heads * feat_dim)

    return tile_heads(cos_head), tile_heads(sin_hi), tile_heads(sin_lo)


# ----------------------------------------------------------------------------
# Wrapper
# ----------------------------------------------------------------------------
def rotary_positional_embeddings(x: jnp.ndarray, d: int, base: int = 10000,
                                 tile_s: int | None = None) -> jnp.ndarray:
    """JAX/Pallas equivalent of RotaryPositionalEmbeddings.forward.

    x: [seq_len, batch, n_heads, feat_dim], feat_dim >= d, d even.
    """
    S, B, H, F = x.shape
    assert d % 2 == 0 and 2 <= d <= F, "d must be even and <= feat_dim"
    HF = H * F
    itemsize = jnp.dtype(x.dtype).itemsize

    # Free (contiguous) view: collapse heads into the lane axis.
    x3 = x.reshape(S, B, HF)

    # TODO(synk): the PyTorch module memoizes cos/sin across calls; here the
    # (cheap) tables are rebuilt per call in plain JAX.
    cos_t, sin_hi_t, sin_lo_t = _build_rope_tables(S, d, H, F, base)  # f32 [S, 1, HF]

    # --- tile size: derive from per-generation VMEM so double-buffering fits ---
    if tile_s is None:
        try:
            vmem_bytes = pltpu.get_tpu_info().vmem_capacity_bytes
        except Exception:
            vmem_bytes = 64 * 1024 * 1024  # conservative (v7x-sized) fallback
        budget = vmem_bytes // 8  # stay well under the scoped-VMEM default on all gens
        # per seq-row VMEM cost: x in + out, double-buffered (~4 copies) + 3 f32 tables x2 bufs
        row_bytes = 4 * B * HF * itemsize + 6 * HF * 4
        tile_s = max(1, min(S, budget // max(1, row_bytes)))
        if tile_s >= 8:
            tile_s -= tile_s % 8
    grid = (pl.cdiv(S, tile_s),)

    n_elem = S * B * HF
    cost = pl.CostEstimate(
        flops=6 * n_elem,
        transcendentals=0,
        bytes_accessed=2 * n_elem * itemsize + 3 * S * HF * 4,
    )

    out3 = pl.pallas_call(
        _make_rope_kernel(d // 2, HF),
        out_shape=jax.ShapeDtypeStruct((S, B, HF), x.dtype),
        grid=grid,
        in_specs=[
            pl.BlockSpec((tile_s, B, HF), lambda i: (i, 0, 0)),
            pl.BlockSpec((tile_s, 1, HF), lambda i: (i, 0, 0)),
            pl.BlockSpec((tile_s, 1, HF), lambda i: (i, 0, 0)),
            pl.BlockSpec((tile_s, 1, HF), lambda i: (i, 0, 0)),
        ],
        out_specs=pl.BlockSpec((tile_s, B, HF), lambda i: (i, 0, 0)),
        compiler_params=pltpu.CompilerParams(dimension_semantics=("parallel",)),
        cost_estimate=cost,
        # NOTE: if the caller donates x, add input_output_aliases={0: 0} to avoid
        # a separate HBM output allocation.
    )(x3, cos_t, sin_hi_t, sin_lo_t)

    return out3.reshape(S, B, H, F)


# ----------------------------------------------------------------------------
# Pure-JAX reference (mirrors the PyTorch module's rotate-half formulation)
# ----------------------------------------------------------------------------
def _reference(x, d, base=10000):
    seq_len = x.shape[0]
    theta = 1.0 / (base ** (jnp.arange(0, d, 2, dtype=jnp.float32) / d))
    seq_idx = jnp.arange(seq_len, dtype=jnp.float32)
    idx_theta = jnp.einsum("n,d->nd", seq_idx, theta)
    idx_theta2 = jnp.concatenate([idx_theta, idx_theta], axis=1)
    cos = jnp.cos(idx_theta2)[:, None, None, :]
    sin = jnp.sin(idx_theta2)[:, None, None, :]
    x_rope, x_pass = x[..., :d], x[..., d:]
    d2 = d // 2
    neg_half = jnp.concatenate([-x_rope[..., d2:], x_rope[..., :d2]], axis=-1)
    x_rope = x_rope * cos + neg_half * sin
    return jnp.concatenate([x_rope.astype(x.dtype), x_pass], axis=-1)


if __name__ == "__main__":
    # Case 1: partial rotation (d < feat_dim), auto tile size.
    S, B, H, F, d = 8, 2, 4, 32, 16
    x1 = jax.random.normal(jax.random.PRNGKey(0), (S, B, H, F), dtype=jnp.float32)
    out1 = jax.block_until_ready(rotary_positional_embeddings(x1, d=d, base=10000))
    ref1 = _reference(x1, d=d)
    assert out1.shape == x1.shape and out1.dtype == x1.dtype
    assert jnp.allclose(out1, ref1, atol=1e-5, rtol=1e-5), "mismatch vs reference (case 1)"

    # Case 2: full rotation (d == feat_dim), explicit small tile -> multi-step grid
    # to exercise the pipelined path.
    S2, B2, H2, F2, d2 = 16, 2, 4, 32, 32
    x2 = jax.random.normal(jax.random.PRNGKey(1), (S2, B2, H2, F2), dtype=jnp.float32)
    out2 = jax.block_until_ready(
        rotary_positional_embeddings(x2, d=d2, base=10000, tile_s=2))
    ref2 = _reference(x2, d=d2)
    assert jnp.allclose(out2, ref2, atol=1e-5, rtol=1e-5), "mismatch vs reference (case 2)"

    print("KERNEL_OK")
</pallas_src>

<mosaic_0001>
module attributes {stable_mosaic.version = 11 : i64} {
  func.func @kernel(%arg0: i32, %arg1: memref<8x2x128xf32, #tpu.memory_space<vmem>>, %arg2: memref<8x1x128xf32, #tpu.memory_space<vmem>>, %arg3: memref<8x1x128xf32, #tpu.memory_space<vmem>>, %arg4: memref<8x1x128xf32, #tpu.memory_space<vmem>>, %arg5: memref<8x2x128xf32, #tpu.memory_space<vmem>>) attributes {dimension_semantics = [#tpu.dimension_semantics<parallel>], iteration_bounds = array<i64: 1>, scalar_prefetch = 0 : i64, scratch_operands = 0 : i64, tpu.core_type = #tpu.core_type<tc>, window_params = [{transform_indices = @transform_0, window_bounds = array<i64: 8, 2, 128>}, {transform_indices = @transform_1, window_bounds = array<i64: 8, 1, 128>}, {transform_indices = @transform_2, window_bounds = array<i64: 8, 1, 128>}, {transform_indices = @transform_3, window_bounds = array<i64: 8, 1, 128>}, {transform_indices = @transform_4, window_bounds = array<i64: 8, 2, 128>}]} {
    %c0 = arith.constant 0 : index
    %c0_0 = arith.constant 0 : index
    %c0_1 = arith.constant 0 : index
    %0 = vector.load %arg1[%c0, %c0_0, %c0_1] : memref<8x2x128xf32, #tpu.memory_space<vmem>>, vector<8x2x128xf32>
    %c8_i32 = arith.constant 8 : i32
    %1 = tpu.dynamic_rotate %0 by %c8_i32 dim 2 : vector<8x2x128xf32>, i32 -> vector<8x2x128xf32>
    %c120_i32 = arith.constant 120 : i32
    %2 = tpu.dynamic_rotate %0 by %c120_i32 dim 2 : vector<8x2x128xf32>, i32 -> vector<8x2x128xf32>
    %c0_2 = arith.constant 0 : index
    %c0_3 = arith.constant 0 : index
    %c0_4 = arith.constant 0 : index
    %3 = vector.load %arg2[%c0_2, %c0_3, %c0_4] : memref<8x1x128xf32, #tpu.memory_space<vmem>>, vector<8x1x128xf32>
    %4 = vector.broadcast %3 : vector<8x1x128xf32> to vector<8x2x128xf32>
    %5 = arith.mulf %0, %4 : vector<8x2x128xf32>
    %c0_5 = arith.constant 0 : index
    %c0_6 = arith.constant 0 : index
    %c0_7 = arith.constant 0 : index
    %6 = vector.load %arg3[%c0_5, %c0_6, %c0_7] : memref<8x1x128xf32, #tpu.memory_space<vmem>>, vector<8x1x128xf32>
    %7 = vector.broadcast %6 : vector<8x1x128xf32> to vector<8x2x128xf32>
    %8 = arith.mulf %1, %7 : vector<8x2x128xf32>
    %9 = arith.addf %5, %8 : vector<8x2x128xf32>
    %c0_8 = arith.constant 0 : index
    %c0_9 = arith.constant 0 : index
    %c0_10 = arith.constant 0 : index
    %10 = vector.load %arg4[%c0_8, %c0_9, %c0_10] : memref<8x1x128xf32, #tpu.memory_space<vmem>>, vector<8x1x128xf32>
    %11 = vector.broadcast %10 : vector<8x1x128xf32> to vector<8x2x128xf32>
    %12 = arith.mulf %2, %11 : vector<8x2x128xf32>
    %13 = arith.addf %9, %12 : vector<8x2x128xf32>
    %c0_11 = arith.constant 0 : index
    %c0_12 = arith.constant 0 : index
    %c0_13 = arith.constant 0 : index
    %14 = vector.load %arg5[%c0_11, %c0_12, %c0_13] : memref<8x2x128xf32, #tpu.memory_space<vmem>>, vector<8x2x128xf32>
    tpu.vector_store %arg5[%c0_11, %c0_12, %c0_13], %13 {strides = array<i32>} : memref<8x2x128xf32, #tpu.memory_space<vmem>>, vector<8x2x128xf32>,
    return
  }
  func.func @transform_0(%arg0: i32) -> (i32, i32, i32) {
    %c0_i32 = arith.constant 0 : i32
    %c0_i32_0 = arith.constant 0 : i32
    %c0_i32_1 = arith.constant 0 : i32
    return %arg0, %c0_i32, %c0_i32_0 : i32, i32, i32
  }
  func.func @transform_1(%arg0: i32) -> (i32, i32, i32) {
    %c0_i32 = arith.constant 0 : i32
    %c0_i32_0 = arith.constant 0 : i32
    %c0_i32_1 = arith.constant 0 : i32
    return %arg0, %c0_i32, %c0_i32_0 : i32, i32, i32
  }
  func.func @transform_2(%arg0: i32) -> (i32, i32, i32) {
    %c0_i32 = arith.constant 0 : i32
    %c0_i32_0 = arith.constant 0 : i32
    %c0_i32_1 = arith.constant 0 : i32
    return %arg0, %c0_i32, %c0_i32_0 : i32, i32, i32
  }
  func.func @transform_3(%arg0: i32) -> (i32, i32, i32) {
    %c0_i32 = arith.constant 0 : i32
    %c0_i32_0 = arith.constant 0 : i32
    %c0_i32_1 = arith.constant 0 : i32
    return %arg0, %c0_i32, %c0_i32_0 : i32, i32, i32
  }
  func.func @transform_4(%arg0: i32) -> (i32, i32, i32) {
    %c0_i32 = arith.constant 0 : i32
    %c0_i32_0 = arith.constant 0 : i32
    %c0_i32_1 = arith.constant 0 : i32
    return %arg0, %c0_i32, %c0_i32_0 : i32, i32, i32
  }
}

</mosaic_0001>

<llo_original>
// kernel: tpu_custom_call.1
$region0: #{tpu_custom_call.1}
  #allocation0 [shape = 'u32[]', space=smem, size = 0x4, offset = 0x4, fixed_abs, tag = 'smem constant byte address 0x4 - core index']
  #allocation1 [shape = 'u32[72,128]{1,0:T(1,128)}', space=vmem, size = 0x9000, scoped, tag = 'internal scratch']
  %s0 = inlined_call_operand.hbm [shape: f32[8,2,128], index: 0, kind: input, shape index: {}]
  %s1 = inlined_call_operand.hbm [shape: f32[8,1,128], index: 1, kind: input, shape index: {}]
  %s2 = inlined_call_operand.hbm [shape: f32[8,1,128], index: 2, kind: input, shape index: {}]
  %s3 = inlined_call_operand.hbm [shape: f32[8,1,128], index: 3, kind: input, shape index: {}]
  %s4 = inlined_call_operand.hbm [shape: f32[8,2,128], index: 4, kind: output, shape index: {}]
  %s5 = sld [smem:[#allocation0]]
  $region42: #{tpu_custom_call.1} parent=0
    _
  %s7 = ssub.s32 1, %s5
  %s8 = scalar_select 0, %s7, %s5
  $region1: #{tpu_custom_call.1} parent=0
    #allocation2 [shape = 'u8[8192]{0}', space=vmem, size = 0x2000, scoped, tag = 'input window, operand 0, single buffered']
    #allocation3 [shape = 's32[1]{0}', space=sflag, size = 0x4, scoped, tag = 'scoped memory for tpu_custom_call.1']
    #allocation4 [shape = 's32[1]{0}', space=sflag, size = 0x4, scoped, tag = 'scoped memory for tpu_custom_call.1']
    #allocation5 [shape = 'u8[4096]{0}', space=vmem, size = 0x1000, scoped, tag = 'input window, operand 1, single buffered']
    #allocation6 [shape = 's32[1]{0}', space=sflag, size = 0x4, scoped, tag = 'scoped memory for tpu_custom_call.1']
    #allocation7 [shape = 'u8[4096]{0}', space=vmem, size = 0x1000, scoped, tag = 'input window, operand 2, single buffered']
    #allocation8 [shape = 'u8[4096]{0}', space=vmem, size = 0x1000, scoped, tag = 'input window, operand 3, single buffered']
    #allocation9 [shape = 's32[1]{0}', space=sflag, size = 0x4, scoped, tag = 'scoped memory for tpu_custom_call.1']
    #allocation10 [shape = 'u8[8192]{0}', space=vmem, size = 0x2000, scoped, tag = 'output window, operand 0, single buffered']
    %9 = vsyncpa [#allocation3], 0
    %10 = vsyncpa [#allocation6], 0
    %11 = vsyncpa [#allocation9], 0
    %12 = vsyncpa [#allocation4], 0
    // Predicated region
    $region2: #{tpu_custom_call.1} parent=1 // pred_check
      _
    $region3: #{tpu_custom_call.1} parent=1 // pred_check_branch
      %14 = sbr.rel (0) target = $region5
    $region4: #{tpu_custom_call.1} parent=1 // pred_region
      %16 = vsyncadd [#allocation3], 0
      %s17 = sshll.u32 %s0, 4
      %s18 = int_to_ptr.hbm [resolvable:$true] %s17
      %s19 = sshll.u32 [#allocation2], 4
      %s20 = int_to_ptr.vmem [resolvable:$true] %s19
      %25 = dma.hbm_to_vmem [thread:$0]  %s18, 256, %s20, [#allocation3], 32, 32, 2
    $region5: #{tpu_custom_call.1} parent=1 // pred_fallthru
      _
    // Predicated region
    $region6: #{tpu_custom_call.1} parent=1 // pred_check
      _
    $region7: #{tpu_custom_call.1} parent=1 // pred_check_branch
      %27 = sbr.rel (0) target = $region9
    $region8: #{tpu_custom_call.1} parent=1 // pred_region
      %29 = vsyncadd [#allocation6], 0
      %s30 = sshll.u32 %s1, 4
      %s31 = int_to_ptr.hbm [resolvable:$true] %s30
      %s32 = sshll.u32 [#allocation5], 4
      %s33 = int_to_ptr.vmem [resolvable:$true] %s32
      %38 = dma.hbm_to_vmem [thread:$0]  %s31, 128, %s33, [#allocation6], 16, 16, 1
    $region9: #{tpu_custom_call.1} parent=1 // pred_fallthru
      _
    // Predicated region
    $region10: #{tpu_custom_call.1} parent=1 // pred_check
      _
    $region11: #{tpu_custom_call.1} parent=1 // pred_check_branch
      %40 = sbr.rel (0) target = $region13
    $region12: #{tpu_custom_call.1} parent=1 // pred_region
      %42 = vsyncadd [#allocation6], 0
      %s43 = sshll.u32 %s2, 4
      %s44 = int_to_ptr.hbm [resolvable:$true] %s43
      %s45 = sshll.u32 [#allocation7], 4
      %s46 = int_to_ptr.vmem [resolvable:$true] %s45
      %51 = dma.hbm_to_vmem [thread:$0]  %s44, 128, %s46, [#allocation6], 16, 16, 1
    $region13: #{tpu_custom_call.1} parent=1 // pred_fallthru
      _
    // Predicated region
    $region14: #{tpu_custom_call.1} parent=1 // pred_check
      _
    $region15: #{tpu_custom_call.1} parent=1 // pred_check_branch
      %53 = sbr.rel (0) target = $region17
    $region16: #{tpu_custom_call.1} parent=1 // pred_region
      %55 = vsyncadd [#allocation9], 0
      %s56 = sshll.u32 %s3, 4
      %s57 = int_to_ptr.hbm [resolvable:$true] %s56
      %s58 = sshll.u32 [#allocation8], 4
      %s59 = int_to_ptr.vmem [resolvable:$true] %s58
      %64 = dma.hbm_to_vmem [thread:$0]  %s57, 128, %s59, [#allocation9], 16, 16, 1
    $region17: #{tpu_custom_call.1} parent=1 // pred_fallthru
      _
    // Predicated region
    $region18: #{tpu_custom_call.1} parent=1 // pred_check
      _
    $region19: #{tpu_custom_call.1} parent=1 // pred_check_branch
      %66 = sbr.rel (0) target = $region21
    $region20: #{tpu_custom_call.1} parent=1 // pred_region
      %68 = dma.done [#allocation3], 256
    $region21: #{tpu_custom_call.1} parent=1 // pred_fallthru
      _
    // Predicated region
    $region22: #{tpu_custom_call.1} parent=1 // pred_check
      _
    $region23: #{tpu_custom_call.1} parent=1 // pred_check_branch
      %70 = sbr.rel (0) target = $region25
    $region24: #{tpu_custom_call.1} parent=1 // pred_region
      %72 = dma.done [#allocation6], 128
    $region25: #{tpu_custom_call.1} parent=1 // pred_fallthru
      _
    // Predicated region
    $region26: #{tpu_custom_call.1} parent=1 // pred_check
      _
    $region27: #{tpu_custom_call.1} parent=1 // pred_check_branch
      %74 = sbr.rel (0) target = $region29
    $region28: #{tpu_custom_call.1} parent=1 // pred_region
      %76 = dma.done [#allocation6], 128
    $region29: #{tpu_custom_call.1} parent=1 // pred_fallthru
      _
    // Predicated region
    $region30: #{tpu_custom_call.1} parent=1 // pred_check
      _
    $region31: #{tpu_custom_call.1} parent=1 // pred_check_branch
      %78 = sbr.rel (0) target = $region33
    $region32: #{tpu_custom_call.1} parent=1 // pred_region
      %80 = dma.done [#allocation9], 128
    $region33: #{tpu_custom_call.1} parent=1 // pred_fallthru
      _
    %v81 = vld [vmem:[#allocation2] sm:$0x3]
    %v82 = vld [vmem:[#allocation2 + $0x2] sm:$0x3]
    %v83 = vld [vmem:[#allocation2 + $0x4] sm:$0x3]
    %v84 = vld [vmem:[#allocation2 + $0x6] sm:$0x3]
    %v85 = vld [vmem:[#allocation2 + $0x8] sm:$0x3]
    %v86 = vld [vmem:[#allocation2 + $0xa] sm:$0x3]
    %v87 = vld [vmem:[#allocation2 + $0xc] sm:$0x3]
    %v88 = vld [vmem:[#allocation2 + $0xe] sm:$0x3]
    %89 = vrot.lane.b32.xlu0 %v81, 8
    %v90 = vpop.permute.xlu0 %89
    %91 = vrot.lane.b32.xlu0 %v82, 8
    %v92 = vpop.permute.xlu0 %91
    %93 = vrot.lane.b32.xlu0 %v83, 8
    %v94 = vpop.permute.xlu0 %93
    %95 = vrot.lane.b32.xlu0 %v84, 8
    %v96 = vpop.permute.xlu0 %95
    %97 = vrot.lane.b32.xlu0 %v85, 8
    %v98 = vpop.permute.xlu0 %97
    %99 = vrot.lane.b32.xlu0 %v86, 8
    %v100 = vpop.permute.xlu0 %99
    %101 = vrot.lane.b32.xlu0 %v87, 8
    %v102 = vpop.permute.xlu0 %101
    %103 = vrot.lane.b32.xlu0 %v88, 8
    %v104 = vpop.permute.xlu0 %103
    %105 = vrot.lane.b32.xlu0 %v81, 120
    %v106 = vpop.permute.xlu0 %105
    %107 = vrot.lane.b32.xlu0 %v82, 120
    %v108 = vpop.permute.xlu0 %107
    %109 = vrot.lane.b32.xlu0 %v83, 120
    %v110 = vpop.permute.xlu0 %109
    %111 = vrot.lane.b32.xlu0 %v84, 120
    %v112 = vpop.permute.xlu0 %111
    %113 = vrot.lane.b32.xlu0 %v85, 120
    %v114 = vpop.permute.xlu0 %113
    %115 = vrot.lane.b32.xlu0 %v86, 120
    %v116 = vpop.permute.xlu0 %115
    %117 = vrot.lane.b32.xlu0 %v87, 120
    %v118 = vpop.permute.xlu0 %117
    %119 = vrot.lane.b32.xlu0 %v88, 120
    %v120 = vpop.permute.xlu0 %119
    %v121 = vld [vmem:[#allocation5] sm:$0x1]
    %v122 = vld [vmem:[#allocation5 + $0x1] sm:$0x1]
    %v123 = vld [vmem:[#allocation5 + $0x2] sm:$0x1]
    %v124 = vld [vmem:[#allocation5 + $0x3] sm:$0x1]
    %v125 = vld [vmem:[#allocation5 + $0x4] sm:$0x1]
    %v126 = vld [vmem:[#allocation5 + $0x5] sm:$0x1]
    %v127 = vld [vmem:[#allocation5 + $0x6] sm:$0x1]
    %v128 = vld [vmem:[#allocation5 + $0x7] sm:$0x1]
    %v137 = vperm.slane %v121, 0
    %v138 = vperm.slane %v122, 0
    %v139 = vperm.slane %v123, 0
    %v140 = vperm.slane %v124, 0
    %v141 = vperm.slane %v125, 0
    %v142 = vperm.slane %v126, 0
    %v143 = vperm.slane %v127, 0
    %v144 = vperm.slane %v128, 0
    %v153 = vmul.f32 %v81, %v137
    %v154 = vmul.f32 %v82, %v138
    %v155 = vmul.f32 %v83, %v139
    %v156 = vmul.f32 %v84, %v140
    %v157 = vmul.f32 %v85, %v141
    %v158 = vmul.f32 %v86, %v142
    %v159 = vmul.f32 %v87, %v143
    %v160 = vmul.f32 %v88, %v144
    %v161 = vld [vmem:[#allocation7] sm:$0x1]
    %v162 = vld [vmem:[#allocation7 + $0x1] sm:$0x1]
    %v163 = vld [vmem:[#allocation7 + $0x2] sm:$0x1]
    %v164 = vld [vmem:[#allocation7 + $0x3] sm:$0x1]
    %v165 = vld [vmem:[#allocation7 + $0x4] sm:$0x1]
    %v166 = vld [vmem:[#allocation7 + $0x5] sm:$0x1]
    %v167 = vld [vmem:[#allocation7 + $0x6] sm:$0x1]
    %v168 = vld [vmem:[#allocation7 + $0x7] sm:$0x1]
    %v177 = vperm.slane %v161, 0
    %v178 = vperm.slane %v162, 0
    %v179 = vperm.slane %v163, 0
    %v180 = vperm.slane %v164, 0
    %v181 = vperm.slane %v165, 0
    %v182 = vperm.slane %v166, 0
    %v183 = vperm.slane %v167, 0
    %v184 = vperm.slane %v168, 0
    %v193 = vmul.f32 %v90, %v177
    %v194 = vmul.f32 %v92, %v178
    %v195 = vmul.f32 %v94, %v179
    %v196 = vmul.f32 %v96, %v180
    %v197 = vmul.f32 %v98, %v181
    %v198 = vmul.f32 %v100, %v182
    %v199 = vmul.f32 %v102, %v183
    %v200 = vmul.f32 %v104, %v184
    %v201 = vadd.f32 %v153, %v193
    %v202 = vadd.f32 %v154, %v194
    %v203 = vadd.f32 %v155, %v195
    %v204 = vadd.f32 %v156, %v196
    %v205 = vadd.f32 %v157, %v197
    %v206 = vadd.f32 %v158, %v198
    %v207 = vadd.f32 %v159, %v199
    %v208 = vadd.f32 %v160, %v200
    %v209 = vld [vmem:[#allocation8] sm:$0x1]
    %v210 = vld [vmem:[#allocation8 + $0x1] sm:$0x1]
    %v211 = vld [vmem:[#allocation8 + $0x2] sm:$0x1]
    %v212 = vld [vmem:[#allocation8 + $0x3] sm:$0x1]
    %v213 = vld [vmem:[#allocation8 + $0x4] sm:$0x1]
    %v214 = vld [vmem:[#allocation8 + $0x5] sm:$0x1]
    %v215 = vld [vmem:[#allocation8 + $0x6] sm:$0x1]
    %v216 = vld [vmem:[#allocation8 + $0x7] sm:$0x1]
    %v225 = vperm.slane %v209, 0
    %v226 = vperm.slane %v210, 0
    %v227 = vperm.slane %v211, 0
    %v228 = vperm.slane %v212, 0
    %v229 = vperm.slane %v213, 0
    %v230 = vperm.slane %v214, 0
    %v231 = vperm.slane %v215, 0
    %v232 = vperm.slane %v216, 0
    %v241 = vmul.f32 %v106, %v225
    %v242 = vmul.f32 %v108, %v226
    %v243 = vmul.f32 %v110, %v227
    %v244 = vmul.f32 %v112, %v228
    %v245 = vmul.f32 %v114, %v229
    %v246 = vmul.f32 %v116, %v230
    %v247 = vmul.f32 %v118, %v231
    %v248 = vmul.f32 %v120, %v232
    %v249 = vadd.f32 %v201, %v241
    %v250 = vadd.f32 %v202, %v242
    %v251 = vadd.f32 %v203, %v243
    %v252 = vadd.f32 %v204, %v244
    %v253 = vadd.f32 %v205, %v245
    %v254 = vadd.f32 %v206, %v246
    %v255 = vadd.f32 %v207, %v247
    %v256 = vadd.f32 %v208, %v248
    %257 = vst [vmem:[#allocation10] sm:$0x3] %v249
    %258 = vst [vmem:[#allocation10 + $0x2] sm:$0x3] %v250
    %259 = vst [vmem:[#allocation10 + $0x4] sm:$0x3] %v251
    %260 = vst [vmem:[#allocation10 + $0x6] sm:$0x3] %v252
    %261 = vst [vmem:[#allocation10 + $0x8] sm:$0x3] %v253
    %262 = vst [vmem:[#allocation10 + $0xa] sm:$0x3] %v254
    %263 = vst [vmem:[#allocation10 + $0xc] sm:$0x3] %v255
    %264 = vst [vmem:[#allocation10 + $0xe] sm:$0x3] %v256
    // Predicated region
    $region34: #{tpu_custom_call.1} parent=1 // pred_check
      _
    $region35: #{tpu_custom_call.1} parent=1 // pred_check_branch
      %266 = sbr.rel (0) target = $region37
    $region36: #{tpu_custom_call.1} parent=1 // pred_region
      %268 = vsyncadd [#allocation4], 0
      %s269 = sshll.u32 [#allocation10], 4
      %s270 = int_to_ptr.vmem [resolvable:$true] %s269
      %s271 = sshll.u32 %s4, 4
      %s272 = int_to_ptr.hbm [resolvable:$true] %s271
      %277 = dma.vmem_to_hbm [thread:$0]  %s270, 256, %s272, [#allocation4], 32, 32, 2
    $region37: #{tpu_custom_call.1} parent=1 // pred_fallthru
      _
    // Predicated region
    $region38: #{tpu_custom_call.1} parent=1 // pred_check
      _
    $region39: #{tpu_custom_call.1} parent=1 // pred_check_branch
      %279 = sbr.rel (0) target = $region41
    $region40: #{tpu_custom_call.1} parent=1 // pred_region
      %281 = dma.done [#allocation4], 256
    $region41: #{tpu_custom_call.1} parent=1 // pred_fallthru
      _
    %282 = vsyncpa [#allocation3], 1
    %283 = vsyncpa [#allocation6], 1
    %284 = vsyncpa [#allocation9], 1
    %285 = vsyncpa [#allocation4], 1

</llo_original>
